<compile_context>
chip_gen: v7x
topology: tpu7x:2x2x1
jax: 0.10.0
libtpu: 0.0.40
codegen_flags: <defaults>
</compile_context>

<pallas_src>
import functools

import jax
import jax.numpy as jnp
from jax.experimental import pallas as pl
from jax.experimental.pallas import tpu as pltpu

EPS = 1e-6                   # Charbonnier epsilon (matches the PyTorch module)
LANES = 128                  # TPU lane width
MIN_SUB = 32                 # sublane multiple for multi-block tiles (covers f32/bf16/int8)
CHUNK_ROWS = 1024            # in-kernel row chunk -> f32 temporaries <= 512 KiB
MAX_BLOCK_BYTES = 4 << 20    # per-input, per-pipeline-buffer DMA block (4 MiB)
VMEM_LIMIT_BYTES = 32 << 20  # raised scoped-VMEM so 4 MiB blocks also fit on v5e
MIN_PALLAS_ELEMS = 4096      # pyramid levels smaller than this stay in plain XLA


def _loss_partial_kernel(low_ref, high_ref, out_ref, *, charbonnier, tile_rows,
                         valid_rows, ragged):
    """One grid step: reduce a (tile_rows, 128) block to a (1, 128) partial sum."""
    block = pl.program_id(0)
    acc = jnp.zeros((1, LANES), jnp.float32)
    if ragged:
        # Rows still valid inside this block (>= tile_rows for all but the last one).
        limit = valid_rows - block * tile_rows

    # Static (trace-time) chunk loop: bounds VMEM temporaries without hurting the
    # 4 MiB pipelined DMA block.
    start = 0
    while start < tile_rows:
        size = min(CHUNK_ROWS, tile_rows - start)
        low = low_ref[start:start + size, :].astype(jnp.float32)
        high = high_ref[start:start + size, :].astype(jnp.float32)
        diff = low - high
        if charbonnier:
            x = diff * diff + jnp.float32(EPS)
            # x * rsqrt(x) == sqrt(x) for x > 0; keeps the transcendental on the EUP.
            err = x * jax.lax.rsqrt(x)
        else:
            err = jnp.abs(diff)
        if ragged:
            # Zero the out-of-bounds rows of the ragged last block BEFORE reducing
            # (OOB block reads are unspecified; NaN/Inf are discarded by the select).
            row = jax.lax.broadcasted_iota(jnp.int32, (size, 1), 0) + start
            err = jnp.where(row < limit, err, jnp.float32(0.0))
        # Sublane reduce only; the cross-lane / cross-block reduce happens once outside.
        acc = acc + jnp.sum(err, axis=0, keepdims=True)
        start += size

    out_ref[...] = acc


def _pallas_error_sum(low, high, *, charbonnier, max_block_bytes=MAX_BLOCK_BYTES):
    """Sum over all elements of |low-high| or sqrt((low-high)^2 + eps), via Pallas.

    Requires low.size == high.size and low.size % 128 == 0.  Mixed input dtypes are
    allowed; both sides are upcast to f32 inside the kernel.
    """
    assert int(low.size) == int(high.size), (low.shape, high.shape)
    n = int(low.size)
    assert n % LANES == 0, n
    rows = n // LANES

    itemsize = max(low.dtype.itemsize, high.dtype.itemsize)
    max_rows = max(MIN_SUB, (max_block_bytes // (LANES * itemsize)) // MIN_SUB * MIN_SUB)
    if rows <= max_rows:
        tile_rows, num_blocks = rows, 1          # single block == full array dims
    else:
        tile_rows, num_blocks = max_rows, pl.cdiv(rows, max_rows)
    ragged = (rows % tile_rows) != 0             # last block reads past the array end

    slab_low = low.reshape(rows, LANES)          # relabel of contiguous data, no pad
    slab_high = high.reshape(rows, LANES)

    kernel = functools.partial(
        _loss_partial_kernel, charbonnier=charbonnier, tile_rows=tile_rows,
        valid_rows=rows, ragged=ragged)

    partials = pl.pallas_call(
        kernel,
        out_shape=jax.ShapeDtypeStruct((num_blocks, 1, LANES), jnp.float32),
        grid_spec=pltpu.PrefetchScalarGridSpec(
            num_scalar_prefetch=0,
            grid=(num_blocks,),
            in_specs=[
                pl.BlockSpec((tile_rows, LANES), lambda i: (i, 0)),
                pl.BlockSpec((tile_rows, LANES), lambda i: (i, 0)),
            ],
            # Lane-dense (1,128) partial per block; leading dim squeezed.
            out_specs=pl.BlockSpec((None, 1, LANES), lambda i: (i, 0, 0)),
        ),
        compiler_params=pltpu.CompilerParams(
            dimension_semantics=("parallel",),    # blocks independent -> megacore OK
            vmem_limit_bytes=VMEM_LIMIT_BYTES,
        ),
        cost_estimate=pl.CostEstimate(
            flops=5 * n,
            transcendentals=n if charbonnier else 0,
            bytes_accessed=n * (low.dtype.itemsize + high.dtype.itemsize)
            + num_blocks * LANES * 4,
        ),
    )(slab_low, slab_high)

    return jnp.sum(partials)


def _jax_error_mean(low, high, charbonnier):
    """Plain-XLA per-level loss (used for tiny / non-lane-aligned levels and as ref)."""
    d = low.astype(jnp.float32) - high.astype(jnp.float32)
    err = jnp.sqrt(d * d + jnp.float32(EPS)) if charbonnier else jnp.abs(d)
    return jnp.mean(err)


def _avg_pool_2x2(x):
    """nn.AvgPool2d(2, 2) on NCHW (no padding, floor mode)."""
    n, c, h, w = x.shape
    h2, w2 = h // 2, w // 2
    x = x[:, :, : h2 * 2, : w2 * 2]
    x = x.reshape(n, c, h2, 2, w2, 2)
    return x.mean(axis=(3, 5))


class UnetDpsvLoss:
    """Pallas port of Unet_dpsv_Loss.forward(output, target).

    `output` is a list of predictions, full resolution first, halving per level;
    `target` is the full-resolution reference.
    """

    def __init__(self, charbonnier=False, min_pallas_elems=MIN_PALLAS_ELEMS):
        self.charbonnier = charbonnier
        self.min_pallas_elems = min_pallas_elems

    def _level_loss(self, low, high):
        n = int(low.size)
        # Tiny levels (and levels whose flat size is not lane-aligned) are cheaper in
        # plain XLA than paying a pallas_call launch + pipeline prologue/epilogue.
        # TODO(synk): fold all sub-resolution levels into a single pallas_call via a
        # scalar-prefetched per-block level/scale table if launch overhead matters.
        if n < self.min_pallas_elems or n % LANES != 0:
            return _jax_error_mean(low, high, self.charbonnier)
        total = _pallas_error_sum(low, high, charbonnier=self.charbonnier)
        return total / jnp.float32(n)

    def __call__(self, output, target):
        # TODO(synk): the 2x2 avg-pool target pyramid stays in plain JAX; fusing it
        # into the level-k loss kernel needs an (H,W)-aware block layout.
        targets = [target]
        t = target
        for _ in range(len(output) - 1):
            t = _avg_pool_2x2(t)
            targets.append(t)
        loss = jnp.float32(0.0)
        for low, high in zip(output, targets):
            loss = loss + self._level_loss(low, high)
        return loss


def _reference_loss(output, target, charbonnier):
    """Plain-JAX reference matching the PyTorch module."""
    targets = [target]
    t = target
    for _ in range(len(output) - 1):
        t = _avg_pool_2x2(t)
        targets.append(t)
    loss = jnp.float32(0.0)
    for low, high in zip(output, targets):
        loss = loss + _jax_error_mean(low, high, charbonnier)
    return loss


if __name__ == "__main__":
    key = jax.random.PRNGKey(0)
    ks = jax.random.split(key, 7)
    # NCHW, deep-supervision outputs: full resolution + 3 halvings.  The two largest
    # levels go through the Pallas kernel; the two smallest take the plain-XLA path.
    target = jax.random.normal(ks[0], (2, 4, 64, 64), dtype=jnp.float32)
    output = [
        jax.random.normal(ks[1], (2, 4, 64, 64), dtype=jnp.float32),
        jax.random.normal(ks[2], (2, 4, 32, 32), dtype=jnp.float32),
        jax.random.normal(ks[3], (2, 4, 16, 16), dtype=jnp.float32),
        jax.random.normal(ks[4], (2, 4, 8, 8), dtype=jnp.float32),
    ]

    # Module default is plain L1 (charbonnier=False); also check the Charbonnier variant.
    for charbonnier in (False, True):
        loss_fn = UnetDpsvLoss(charbonnier=charbonnier)
        loss = jax.block_until_ready(jax.jit(loss_fn)(output, target))
        ref = jax.block_until_ready(_reference_loss(output, target, charbonnier))
        assert jnp.allclose(loss, ref, rtol=1e-5, atol=2e-5), (charbonnier, loss, ref)

    # Extra check: exercise the ragged multi-block (masked last block) path and mixed
    # bf16/f32 inputs by forcing an artificially small block size (32 rows over 40).
    a32 = jax.random.normal(ks[5], (40, LANES), dtype=jnp.float32)
    b32 = jax.random.normal(ks[6], (40, LANES), dtype=jnp.float32)
    a16 = a32.astype(jnp.bfloat16)
    for charbonnier in (False, True):
        fn = jax.jit(functools.partial(_pallas_error_sum, charbonnier=charbonnier,
                                       max_block_bytes=MIN_SUB * LANES * 4))
        got = jax.block_until_ready(fn(a16, b32)) / jnp.float32(a32.size)
        want = _jax_error_mean(a16, b32, charbonnier)
        assert jnp.allclose(got, want, rtol=1e-5, atol=2e-5), (charbonnier, got, want)

    print("KERNEL_OK")
</pallas_src>

<mosaic_0001>
module attributes {stable_mosaic.version = 11 : i64} {
  func.func @_loss_partial_kernel(%arg0: i32, %arg1: memref<64x128xf32, #tpu.memory_space<vmem>>, %arg2: memref<64x128xf32, #tpu.memory_space<vmem>>, %arg3: memref<1x1x128xf32, #tpu.memory_space<vmem>>) attributes {dimension_semantics = [#tpu.dimension_semantics<parallel>], iteration_bounds = array<i64: 1>, scalar_prefetch = 0 : i64, scratch_operands = 0 : i64, tpu.core_type = #tpu.core_type<tc>, window_params = [{transform_indices = @transform_0, window_bounds = array<i64: 64, 128>}, {transform_indices = @transform_1, window_bounds = array<i64: 64, 128>}, {transform_indices = @transform_2, window_bounds = array<i64: 1, 1, 128>}]} {
    %cst = arith.constant 0.000000e+00 : f32
    %0 = vector.broadcast %cst : f32 to vector<1x128xf32>
    %c0 = arith.constant 0 : index
    %c0_0 = arith.constant 0 : index
    %1 = vector.load %arg1[%c0, %c0_0] : memref<64x128xf32, #tpu.memory_space<vmem>>, vector<64x128xf32>
    %c0_1 = arith.constant 0 : index
    %c0_2 = arith.constant 0 : index
    %2 = vector.load %arg2[%c0_1, %c0_2] : memref<64x128xf32, #tpu.memory_space<vmem>>, vector<64x128xf32>
    %3 = arith.subf %1, %2 : vector<64x128xf32>
    %4 = math.absf %3 : vector<64x128xf32>
    %cst_3 = arith.constant dense<0.000000e+00> : vector<128xf32>
    %5 = vector.multi_reduction <add>, %4, %cst_3 [0] : vector<64x128xf32> to vector<128xf32>
    %6 = vector.shape_cast %5 : vector<128xf32> to vector<1x128xf32>
    %7 = arith.addf %0, %6 : vector<1x128xf32>
    %c0_4 = arith.constant 0 : index
    %c0_5 = arith.constant 0 : index
    %c0_6 = arith.constant 0 : index
    %8 = vector.load %arg3[%c0_4, %c0_5, %c0_6] : memref<1x1x128xf32, #tpu.memory_space<vmem>>, vector<1x1x128xf32>
    %9 = vector.shape_cast %8 : vector<1x1x128xf32> to vector<1x128xf32>
    %10 = vector.shape_cast %7 : vector<1x128xf32> to vector<1x1x128xf32>
    tpu.vector_store %arg3[%c0_4, %c0_5, %c0_6], %10 {strides = array<i32>} : memref<1x1x128xf32, #tpu.memory_space<vmem>>, vector<1x1x128xf32>,
    return
  }
  func.func @transform_0(%arg0: i32) -> (i32, i32) {
    %c0_i32 = arith.constant 0 : i32
    %c0_i32_0 = arith.constant 0 : i32
    return %arg0, %c0_i32 : i32, i32
  }
  func.func @transform_1(%arg0: i32) -> (i32, i32) {
    %c0_i32 = arith.constant 0 : i32
    %c0_i32_0 = arith.constant 0 : i32
    return %arg0, %c0_i32 : i32, i32
  }
  func.func @transform_2(%arg0: i32) -> (i32, i32, i32) {
    %c0_i32 = arith.constant 0 : i32
    %c0_i32_0 = arith.constant 0 : i32
    %c0_i32_1 = arith.constant 0 : i32
    return %arg0, %c0_i32, %c0_i32_0 : i32, i32, i32
  }
}

module attributes {stable_mosaic.version = 11 : i64} {
  func.func @_loss_partial_kernel(%arg0: i32, %arg1: memref<256x128xf32, #tpu.memory_space<vmem>>, %arg2: memref<256x128xf32, #tpu.memory_space<vmem>>, %arg3: memref<1x1x128xf32, #tpu.memory_space<vmem>>) attributes {dimension_semantics = [#tpu.dimension_semantics<parallel>], iteration_bounds = array<i64: 1>, scalar_prefetch = 0 : i64, scratch_operands = 0 : i64, tpu.core_type = #tpu.core_type<tc>, window_params = [{transform_indices = @transform_0, window_bounds = array<i64: 256, 128>}, {transform_indices = @transform_1, window_bounds = array<i64: 256, 128>}, {transform_indices = @transform_2, window_bounds = array<i64: 1, 1, 128>}]} {
    %cst = arith.constant 0.000000e+00 : f32
    %0 = vector.broadcast %cst : f32 to vector<1x128xf32>
    %c0 = arith.constant 0 : index
    %c0_0 = arith.constant 0 : index
    %1 = vector.load %arg1[%c0, %c0_0] : memref<256x128xf32, #tpu.memory_space<vmem>>, vector<256x128xf32>
    %c0_1 = arith.constant 0 : index
    %c0_2 = arith.constant 0 : index
    %2 = vector.load %arg2[%c0_1, %c0_2] : memref<256x128xf32, #tpu.memory_space<vmem>>, vector<256x128xf32>
    %3 = arith.subf %1, %2 : vector<256x128xf32>
    %4 = math.absf %3 : vector<256x128xf32>
    %cst_3 = arith.constant dense<0.000000e+00> : vector<128xf32>
    %5 = vector.multi_reduction <add>, %4, %cst_3 [0] : vector<256x128xf32> to vector<128xf32>
    %6 = vector.shape_cast %5 : vector<128xf32> to vector<1x128xf32>
    %7 = arith.addf %0, %6 : vector<1x128xf32>
    %c0_4 = arith.constant 0 : index
    %c0_5 = arith.constant 0 : index
    %c0_6 = arith.constant 0 : index
    %8 = vector.load %arg3[%c0_4, %c0_5, %c0_6] : memref<1x1x128xf32, #tpu.memory_space<vmem>>, vector<1x1x128xf32>
    %9 = vector.shape_cast %8 : vector<1x1x128xf32> to vector<1x128xf32>
    %10 = vector.shape_cast %7 : vector<1x128xf32> to vector<1x1x128xf32>
    tpu.vector_store %arg3[%c0_4, %c0_5, %c0_6], %10 {strides = array<i32>} : memref<1x1x128xf32, #tpu.memory_space<vmem>>, vector<1x1x128xf32>,
    return
  }
  func.func @transform_0(%arg0: i32) -> (i32, i32) {
    %c0_i32 = arith.constant 0 : i32
    %c0_i32_0 = arith.constant 0 : i32
    return %arg0, %c0_i32 : i32, i32
  }
  func.func @transform_1(%arg0: i32) -> (i32, i32) {
    %c0_i32 = arith.constant 0 : i32
    %c0_i32_0 = arith.constant 0 : i32
    return %arg0, %c0_i32 : i32, i32
  }
  func.func @transform_2(%arg0: i32) -> (i32, i32, i32) {
    %c0_i32 = arith.constant 0 : i32
    %c0_i32_0 = arith.constant 0 : i32
    %c0_i32_1 = arith.constant 0 : i32
    return %arg0, %c0_i32, %c0_i32_0 : i32, i32, i32
  }
}

</mosaic_0001>

<llo_original>
// kernel: _unnamed_function_.3
$region0: #{_unnamed_function_.3}
  #allocation0 [shape = 'u32[]', space=smem, size = 0x4, offset = 0x4, fixed_abs, tag = 'smem constant byte address 0x4 - core index']
  #allocation1 [shape = 'u32[144,128]{1,0:T(1,128)}', space=vmem, size = 0x12000, scoped, tag = 'internal scratch']
  %s0 = inlined_call_operand.vmem [shape: f32[64,128], index: 0, kind: input, shape index: {}]
  %s1 = inlined_call_operand.vmem [shape: f32[64,128], index: 1, kind: input, shape index: {}]
  %s2 = inlined_call_operand.vmem [shape: f32[1,1,128], index: 2, kind: output, shape index: {}]
  %s3 = sld [smem:[#allocation0]]
  $region18: #{_unnamed_function_.3} parent=0
    _
  %s5 = ssub.s32 1, %s3
  %s6 = scalar_select 0, %s5, %s3
  // Predicated region
  $region2: #{_unnamed_function_.3} parent=0 // pred_check
    _
  $region3: #{_unnamed_function_.3} parent=0 // pred_check_branch
    %8 = sbr.rel (0) target = $region5
  $region4: #{_unnamed_function_.3} parent=0 // pred_region
    _
  $region5: #{_unnamed_function_.3} parent=0 // pred_fallthru
    _
  // Predicated region
  $region6: #{_unnamed_function_.3} parent=0 // pred_check
    _
  $region7: #{_unnamed_function_.3} parent=0 // pred_check_branch
    %10 = sbr.rel (0) target = $region9
  $region8: #{_unnamed_function_.3} parent=0 // pred_region
    _
  $region9: #{_unnamed_function_.3} parent=0 // pred_fallthru
    _
  %v11 = vld [vmem:[%s0] sm:$0xff]
  %v12 = vld [vmem:[%s0 + $0x8] sm:$0xff]
  %v13 = vld [vmem:[%s0 + $0x10] sm:$0xff]
  %v14 = vld [vmem:[%s0 + $0x18] sm:$0xff]
  %v15 = vld [vmem:[%s0 + $0x20] sm:$0xff]
  %v16 = vld [vmem:[%s0 + $0x28] sm:$0xff]
  %v17 = vld [vmem:[%s0 + $0x30] sm:$0xff]
  %v18 = vld [vmem:[%s0 + $0x38] sm:$0xff]
  %v19 = vld [vmem:[%s1] sm:$0xff]
  %v20 = vld [vmem:[%s1 + $0x8] sm:$0xff]
  %v21 = vld [vmem:[%s1 + $0x10] sm:$0xff]
  %v22 = vld [vmem:[%s1 + $0x18] sm:$0xff]
  %v23 = vld [vmem:[%s1 + $0x20] sm:$0xff]
  %v24 = vld [vmem:[%s1 + $0x28] sm:$0xff]
  %v25 = vld [vmem:[%s1 + $0x30] sm:$0xff]
  %v26 = vld [vmem:[%s1 + $0x38] sm:$0xff]
  %v27 = vsub.f32 %v11, %v19
  %v28 = vsub.f32 %v12, %v20
  %v29 = vsub.f32 %v13, %v21
  %v30 = vsub.f32 %v14, %v22
  %v31 = vsub.f32 %v15, %v23
  %v32 = vsub.f32 %v16, %v24
  %v33 = vsub.f32 %v17, %v25
  %v34 = vsub.f32 %v18, %v26
  %v35 = vand.u32 2147483647, %v27
  %v36 = vand.u32 2147483647, %v28
  %v37 = vand.u32 2147483647, %v29
  %v38 = vand.u32 2147483647, %v30
  %v39 = vand.u32 2147483647, %v31
  %v40 = vand.u32 2147483647, %v32
  %v41 = vand.u32 2147483647, %v33
  %v42 = vand.u32 2147483647, %v34
  %v43 = vadd.f32 %v35, %v36
  %v44 = vadd.f32 %v43, %v37
  %v45 = vadd.f32 %v44, %v38
  %v46 = vadd.f32 %v45, %v39
  %v47 = vadd.f32 %v46, %v40
  %v48 = vadd.f32 %v47, %v41
  %v49 = vadd.f32 %v48, %v42
  %v50 = vrot.slane %v49, 4
  %v51 = vadd.f32 %v49, %v50
  %v52 = vrot.slane %v51, 2
  %v53 = vadd.f32 %v51, %v52
  %v54 = vrot.slane %v53, 1
  %v55 = vadd.f32 %v53, %v54
  %v56 = vadd.f32 %v55, 0.0
  %57 = vst [vmem:[%s2] sm:$0x1] %v56
  // Predicated region
  $region10: #{_unnamed_function_.3} parent=0 // pred_check
    _
  $region11: #{_unnamed_function_.3} parent=0 // pred_check_branch
    %59 = sbr.rel (0) target = $region13
  $region12: #{_unnamed_function_.3} parent=0 // pred_region
    _
  $region13: #{_unnamed_function_.3} parent=0 // pred_fallthru
    _
  // Predicated region
  $region14: #{_unnamed_function_.3} parent=0 // pred_check
    _
  $region15: #{_unnamed_function_.3} parent=0 // pred_check_branch
    %61 = sbr.rel (0) target = $region17
  $region16: #{_unnamed_function_.3} parent=0 // pred_region
    _
  $region17: #{_unnamed_function_.3} parent=0 // pred_fallthru
    _

// kernel: _unnamed_function_.2
$region0: #{_unnamed_function_.2}
  #allocation0 [shape = 'u32[]', space=smem, size = 0x4, offset = 0x4, fixed_abs, tag = 'smem constant byte address 0x4 - core index']
  #allocation1 [shape = 'u32[144,128]{1,0:T(1,128)}', space=vmem, size = 0x12000, scoped, tag = 'internal scratch']
  %s0 = inlined_call_operand.vmem [shape: f32[256,128], index: 0, kind: input, shape index: {}]
  %s1 = inlined_call_operand.vmem [shape: f32[256,128], index: 1, kind: input, shape index: {}]
  %s2 = inlined_call_operand.vmem [shape: f32[1,1,128], index: 2, kind: output, shape index: {}]
  %s3 = sld [smem:[#allocation0]]
  $region18: #{_unnamed_function_.2} parent=0
    _
  %s5 = ssub.s32 1, %s3
  %s6 = scalar_select 0, %s5, %s3
  // Predicated region
  $region2: #{_unnamed_function_.2} parent=0 // pred_check
    _
  $region3: #{_unnamed_function_.2} parent=0 // pred_check_branch
    %8 = sbr.rel (0) target = $region5
  $region4: #{_unnamed_function_.2} parent=0 // pred_region
    _
  $region5: #{_unnamed_function_.2} parent=0 // pred_fallthru
    _
  // Predicated region
  $region6: #{_unnamed_function_.2} parent=0 // pred_check
    _
  $region7: #{_unnamed_function_.2} parent=0 // pred_check_branch
    %10 = sbr.rel (0) target = $region9
  $region8: #{_unnamed_function_.2} parent=0 // pred_region
    _
  $region9: #{_unnamed_function_.2} parent=0 // pred_fallthru
    _
  %v11 = vld [vmem:[%s0] sm:$0xff]
  %v12 = vld [vmem:[%s0 + $0x8] sm:$0xff]
  %v13 = vld [vmem:[%s0 + $0x10] sm:$0xff]
  %v14 = vld [vmem:[%s0 + $0x18] sm:$0xff]
  %v15 = vld [vmem:[%s0 + $0x20] sm:$0xff]
  %v16 = vld [vmem:[%s0 + $0x28] sm:$0xff]
  %v17 = vld [vmem:[%s0 + $0x30] sm:$0xff]
  %v18 = vld [vmem:[%s0 + $0x38] sm:$0xff]
  %v19 = vld [vmem:[%s0 + $0x40] sm:$0xff]
  %v20 = vld [vmem:[%s0 + $0x48] sm:$0xff]
  %v21 = vld [vmem:[%s0 + $0x50] sm:$0xff]
  %v22 = vld [vmem:[%s0 + $0x58] sm:$0xff]
  %v23 = vld [vmem:[%s0 + $0x60] sm:$0xff]
  %v24 = vld [vmem:[%s0 + $0x68] sm:$0xff]
  %v25 = vld [vmem:[%s0 + $0x70] sm:$0xff]
  %v26 = vld [vmem:[%s0 + $0x78] sm:$0xff]
  %v27 = vld [vmem:[%s0 + $0x80] sm:$0xff]
  %v28 = vld [vmem:[%s0 + $0x88] sm:$0xff]
  %v29 = vld [vmem:[%s0 + $0x90] sm:$0xff]
  %v30 = vld [vmem:[%s0 + $0x98] sm:$0xff]
  %v31 = vld [vmem:[%s0 + $0xa0] sm:$0xff]
  %v32 = vld [vmem:[%s0 + $0xa8] sm:$0xff]
  %v33 = vld [vmem:[%s0 + $0xb0] sm:$0xff]
  %v34 = vld [vmem:[%s0 + $0xb8] sm:$0xff]
  %v35 = vld [vmem:[%s0 + $0xc0] sm:$0xff]
  %v36 = vld [vmem:[%s0 + $0xc8] sm:$0xff]
  %v37 = vld [vmem:[%s0 + $0xd0] sm:$0xff]
  %v38 = vld [vmem:[%s0 + $0xd8] sm:$0xff]
  %v39 = vld [vmem:[%s0 + $0xe0] sm:$0xff]
  %v40 = vld [vmem:[%s0 + $0xe8] sm:$0xff]
  %v41 = vld [vmem:[%s0 + $0xf0] sm:$0xff]
  %v42 = vld [vmem:[%s0 + $0xf8] sm:$0xff]
  %v43 = vld [vmem:[%s1] sm:$0xff]
  %v44 = vld [vmem:[%s1 + $0x8] sm:$0xff]
  %v45 = vld [vmem:[%s1 + $0x10] sm:$0xff]
  %v46 = vld [vmem:[%s1 + $0x18] sm:$0xff]
  %v47 = vld [vmem:[%s1 + $0x20] sm:$0xff]
  %v48 = vld [vmem:[%s1 + $0x28] sm:$0xff]
  %v49 = vld [vmem:[%s1 + $0x30] sm:$0xff]
  %v50 = vld [vmem:[%s1 + $0x38] sm:$0xff]
  %v51 = vld [vmem:[%s1 + $0x40] sm:$0xff]
  %v52 = vld [vmem:[%s1 + $0x48] sm:$0xff]
  %v53 = vld [vmem:[%s1 + $0x50] sm:$0xff]
  %v54 = vld [vmem:[%s1 + $0x58] sm:$0xff]
  %v55 = vld [vmem:[%s1 + $0x60] sm:$0xff]
  %v56 = vld [vmem:[%s1 + $0x68] sm:$0xff]
  %v57 = vld [vmem:[%s1 + $0x70] sm:$0xff]
  %v58 = vld [vmem:[%s1 + $0x78] sm:$0xff]
  %v59 = vld [vmem:[%s1 + $0x80] sm:$0xff]
  %v60 = vld [vmem:[%s1 + $0x88] sm:$0xff]
  %v61 = vld [vmem:[%s1 + $0x90] sm:$0xff]
  %v62 = vld [vmem:[%s1 + $0x98] sm:$0xff]
  %v63 = vld [vmem:[%s1 + $0xa0] sm:$0xff]
  %v64 = vld [vmem:[%s1 + $0xa8] sm:$0xff]
  %v65 = vld [vmem:[%s1 + $0xb0] sm:$0xff]
  %v66 = vld [vmem:[%s1 + $0xb8] sm:$0xff]
  %v67 = vld [vmem:[%s1 + $0xc0] sm:$0xff]
  %v68 = vld [vmem:[%s1 + $0xc8] sm:$0xff]
  %v69 = vld [vmem:[%s1 + $0xd0] sm:$0xff]
  %v70 = vld [vmem:[%s1 + $0xd8] sm:$0xff]
  %v71 = vld [vmem:[%s1 + $0xe0] sm:$0xff]
  %v72 = vld [vmem:[%s1 + $0xe8] sm:$0xff]
  %v73 = vld [vmem:[%s1 + $0xf0] sm:$0xff]
  %v74 = vld [vmem:[%s1 + $0xf8] sm:$0xff]
  %v75 = vsub.f32 %v11, %v43
  %v76 = vsub.f32 %v12, %v44
  %v77 = vsub.f32 %v13, %v45
  %v78 = vsub.f32 %v14, %v46
  %v79 = vsub.f32 %v15, %v47
  %v80 = vsub.f32 %v16, %v48
  %v81 = vsub.f32 %v17, %v49
  %v82 = vsub.f32 %v18, %v50
  %v83 = vsub.f32 %v19, %v51
  %v84 = vsub.f32 %v20, %v52
  %v85 = vsub.f32 %v21, %v53
  %v86 = vsub.f32 %v22, %v54
  %v87 = vsub.f32 %v23, %v55
  %v88 = vsub.f32 %v24, %v56
  %v89 = vsub.f32 %v25, %v57
  %v90 = vsub.f32 %v26, %v58
  %v91 = vsub.f32 %v27, %v59
  %v92 = vsub.f32 %v28, %v60
  %v93 = vsub.f32 %v29, %v61
  %v94 = vsub.f32 %v30, %v62
  %v95 = vsub.f32 %v31, %v63
  %v96 = vsub.f32 %v32, %v64
  %v97 = vsub.f32 %v33, %v65
  %v98 = vsub.f32 %v34, %v66
  %v99 = vsub.f32 %v35, %v67
  %v100 = vsub.f32 %v36, %v68
  %v101 = vsub.f32 %v37, %v69
  %v102 = vsub.f32 %v38, %v70
  %v103 = vsub.f32 %v39, %v71
  %v104 = vsub.f32 %v40, %v72
  %v105 = vsub.f32 %v41, %v73
  %v106 = vsub.f32 %v42, %v74
  %v107 = vand.u32 2147483647, %v75
  %v108 = vand.u32 2147483647, %v76
  %v109 = vand.u32 2147483647, %v77
  %v110 = vand.u32 2147483647, %v78
  %v111 = vand.u32 2147483647, %v79
  %v112 = vand.u32 2147483647, %v80
  %v113 = vand.u32 2147483647, %v81
  %v114 = vand.u32 2147483647, %v82
  %v115 = vand.u32 2147483647, %v83
  %v116 = vand.u32 2147483647, %v84
  %v117 = vand.u32 2147483647, %v85
  %v118 = vand.u32 2147483647, %v86
  %v119 = vand.u32 2147483647, %v87
  %v120 = vand.u32 2147483647, %v88
  %v121 = vand.u32 2147483647, %v89
  %v122 = vand.u32 2147483647, %v90
  %v123 = vand.u32 2147483647, %v91
  %v124 = vand.u32 2147483647, %v92
  %v125 = vand.u32 2147483647, %v93
  %v126 = vand.u32 2147483647, %v94
  %v127 = vand.u32 2147483647, %v95
  %v128 = vand.u32 2147483647, %v96
  %v129 = vand.u32 2147483647, %v97
  %v130 = vand.u32 2147483647, %v98
  %v131 = vand.u32 2147483647, %v99
  %v132 = vand.u32 2147483647, %v100
  %v133 = vand.u32 2147483647, %v101
  %v134 = vand.u32 2147483647, %v102
  %v135 = vand.u32 2147483647, %v103
  %v136 = vand.u32 2147483647, %v104
  %v137 = vand.u32 2147483647, %v105
  %v138 = vand.u32 2147483647, %v106
  %v139 = vadd.f32 %v107, %v108
  %v140 = vadd.f32 %v139, %v109
  %v141 = vadd.f32 %v140, %v110
  %v142 = vadd.f32 %v141, %v111
  %v143 = vadd.f32 %v142, %v112
  %v144 = vadd.f32 %v143, %v113
  %v145 = vadd.f32 %v144, %v114
  %v146 = vadd.f32 %v145, %v115
  %v147 = vadd.f32 %v146, %v116
  %v148 = vadd.f32 %v147, %v117
  %v149 = vadd.f32 %v148, %v118
  %v150 = vadd.f32 %v149, %v119
  %v151 = vadd.f32 %v150, %v120
  %v152 = vadd.f32 %v151, %v121
  %v153 = vadd.f32 %v152, %v122
  %v154 = vadd.f32 %v153, %v123
  %v155 = vadd.f32 %v154, %v124
  %v156 = vadd.f32 %v155, %v125
  %v157 = vadd.f32 %v156, %v126
  %v158 = vadd.f32 %v157, %v127
  %v159 = vadd.f32 %v158, %v128
  %v160 = vadd.f32 %v159, %v129
  %v161 = vadd.f32 %v160, %v130
  %v162 = vadd.f32 %v161, %v131
  %v163 = vadd.f32 %v162, %v132
  %v164 = vadd.f32 %v163, %v133
  %v165 = vadd.f32 %v164, %v134
  %v166 = vadd.f32 %v165, %v135
  %v167 = vadd.f32 %v166, %v136
  %v168 = vadd.f32 %v167, %v137
  %v169 = vadd.f32 %v168, %v138
  %v170 = vrot.slane %v169, 4
  %v171 = vadd.f32 %v169, %v170
  %v172 = vrot.slane %v171, 2
  %v173 = vadd.f32 %v171, %v172
  %v174 = vrot.slane %v173, 1
  %v175 = vadd.f32 %v173, %v174
  %v176 = vadd.f32 %v175, 0.0
  %177 = vst [vmem:[%s2] sm:$0x1] %v176
  // Predicated region
  $region10: #{_unnamed_function_.2} parent=0 // pred_check
    _
  $region11: #{_unnamed_function_.2} parent=0 // pred_check_branch
    %179 = sbr.rel (0) target = $region13
  $region12: #{_unnamed_function_.2} parent=0 // pred_region
    _
  $region13: #{_unnamed_function_.2} parent=0 // pred_fallthru
    _
  // Predicated region
  $region14: #{_unnamed_function_.2} parent=0 // pred_check
    _
  $region15: #{_unnamed_function_.2} parent=0 // pred_check_branch
    %181 = sbr.rel (0) target = $region17
  $region16: #{_unnamed_function_.2} parent=0 // pred_region
    _
  $region17: #{_unnamed_function_.2} parent=0 // pred_fallthru
    _

</llo_original>
